<compile_context>
chip_gen: v7x
topology: tpu7x:2x2x1
jax: 0.10.0
libtpu: 0.0.40
codegen_flags: <defaults>
</compile_context>

<pallas_src>
import functools
import math

import numpy as np

import jax
import jax.numpy as jnp
from jax.experimental import pallas as pl
from jax.experimental.pallas import tpu as pltpu


def _round_up(a: int, m: int) -> int:
    return ((a + m - 1) // m) * m


def _cdiv(a: int, b: int) -> int:
    return -(-a // b)


# --------------------------------------------------------------------------------------
# Kernels
# --------------------------------------------------------------------------------------
def _linear_kernel_multi_k(x_ref, w_ref, b_ref, o_ref, acc_ref):
    """Grid (M/tm, N/tn, K/tk); K streamed last, accumulated in f32 VMEM scratch."""
    @pl.when(pl.program_id(2) == 0)
    def _():
        acc_ref[...] = jnp.zeros_like(acc_ref)

    acc_ref[...] += jnp.dot(
        x_ref[...], w_ref[...], preferred_element_type=jnp.float32
    )

    @pl.when(pl.program_id(2) == pl.num_programs(2) - 1)
    def _():
        # bias block is k-invariant (resident); broadcast-add once at finalize.
        o_ref[...] = (acc_ref[...] + b_ref[...]).astype(o_ref.dtype)


def _linear_kernel_single_k(x_ref, w_ref, b_ref, o_ref):
    """Grid (M/tm, N/tn); whole K in one block -> no accumulator round trip.
    Also covers the W-resident path (tn == Np, tk == Kp, grid (gm, 1))."""
    o_ref[...] = (
        jnp.dot(x_ref[...], w_ref[...], preferred_element_type=jnp.float32)
        + b_ref[...]
    ).astype(o_ref.dtype)


# --------------------------------------------------------------------------------------
# Planning (tile selection per TPU generation, padding-aware)
# --------------------------------------------------------------------------------------
_GEN_CFG = None


def _gen_config():
    """Generation-sized tile targets + VMEM budget (bytes)."""
    global _GEN_CFG
    if _GEN_CFG is not None:
        return _GEN_CFG
    kind = ""
    try:
        kind = jax.devices()[0].device_kind.lower()
    except Exception:
        pass
    if "v6" in kind:
        # v6e: 128 MiB VMEM, needs ~680 flops/byte -> 1024-class output tiles.
        cfg = dict(tm=1024, tn=1024, tk=2048, vmem=64 << 20, cores=1)
    elif "v5 lite" in kind or "v5e" in kind:
        # v5e: compute-bound at ~240 flops/byte; 512 tiles suffice (16 MiB default scoped VMEM).
        cfg = dict(tm=512, tn=512, tk=1024, vmem=32 << 20, cores=1)
    elif "v7" in kind:
        # v7x: only 64 MiB VMEM per TC, 2 TCs/chip -> keep footprint ~13 MiB, feed both cores.
        cfg = dict(tm=768, tn=768, tk=1024, vmem=40 << 20, cores=2)
    else:
        # Unknown generation: v7x-safe conservative defaults.
        cfg = dict(tm=512, tn=512, tk=1024, vmem=32 << 20, cores=1)
    _GEN_CFG = cfg
    return cfg


def _pick_tile(dim: int, target: int, align: int) -> int:
    """Tile near `target` that minimizes padding of `dim` (always a multiple of align)."""
    target = max(target, align)
    if dim <= target:
        return _round_up(dim, align)
    nblocks = _cdiv(dim, target)
    return _round_up(_cdiv(dim, nblocks), align)


def _plan_kn(K, N, cfg, in_dtype, tn_target=None, tk_target=None, w_resident_budget=None):
    """Choose (tk, tn) and padded (Kp, Np). Depends only on (K, N) -> cacheable per module."""
    ib = np.dtype(in_dtype).itemsize
    tn_target = cfg["tn"] if tn_target is None else tn_target
    tk_target = cfg["tk"] if tk_target is None else tk_target
    if w_resident_budget is None:
        w_resident_budget = cfg["vmem"] // 2  # leave >= half the budget for x/out buffers
    Kp_full = _round_up(K, 128)
    Np_full = _round_up(N, 128)
    # W-resident fast path: whole (double-buffered) weight lives in VMEM, x is read once.
    w_resident = 2 * Kp_full * Np_full * ib <= w_resident_budget
    if w_resident:
        tk, tn = Kp_full, Np_full
    else:
        tk = _pick_tile(K, tk_target, 128)
        tn = _pick_tile(N, tn_target, 128)
    return dict(tk=tk, tn=tn, Kp=_round_up(K, tk), Np=_round_up(N, tn),
                w_resident=w_resident)


def _plan_m(M, plan, cfg, in_dtype, out_dtype, tm_target=None):
    """Choose tm from the remaining VMEM budget (and the generation target)."""
    ib = np.dtype(in_dtype).itemsize
    ob = np.dtype(out_dtype).itemsize
    tk, tn, Kp = plan["tk"], plan["tn"], plan["Kp"]
    multi_k = Kp > tk
    m_align = 16 if ib == 2 else 8  # bf16 packs 16 sublanes per vreg
    slack = 2 << 20
    fixed = tk * tn * ib * 2 + tn * 4 * 2 + slack          # W (x2 buf) + bias + headroom
    per_row = tk * ib * 2 + tn * ob * 2 + (tn * 4 if multi_k else 0)
    cap = max((cfg["vmem"] - fixed) // per_row, 8 * m_align)
    cap = (cap // m_align) * m_align
    if tm_target is None:
        # W-resident: grow the streaming block over M as far as the budget allows.
        tm_target = 4096 if plan["w_resident"] else cfg["tm"]
    tm_target = min(tm_target, cap)
    tm = _pick_tile(M, tm_target, m_align)
    # v7x has 2 TensorCores/chip: make sure the "parallel" axes expose >= 2 blocks.
    if cfg.get("cores", 1) > 1 and plan["Np"] == tn and tm >= M and M > m_align:
        tm = _pick_tile(M, max(m_align, _cdiv(M, 2)), m_align)
    return tm


def _pad_params(w, b, plan, in_dtype):
    """Zero-pad + cast W and bias once (cached by LinearPallas)."""
    K, N = w.shape
    Kp, Np = plan["Kp"], plan["Np"]
    if (Kp, Np) != (K, N):
        w = jnp.pad(w, ((0, Kp - K), (0, Np - N)))
    if Np != N:
        b = jnp.pad(b, (0, Np - N))
    return w.astype(in_dtype), b.reshape(1, Np).astype(jnp.float32)


# --------------------------------------------------------------------------------------
# pallas_call dispatch
# --------------------------------------------------------------------------------------
def _run_pallas(xp, wp, bp, *, tm, tn, tk, out_dtype, vmem_limit):
    Mp, Kp = xp.shape
    _, Np = wp.shape
    gm, gn, gk = Mp // tm, Np // tn, Kp // tk
    out_shape = jax.ShapeDtypeStruct((Mp, Np), out_dtype)

    if gk == 1:
        return pl.pallas_call(
            _linear_kernel_single_k,
            out_shape=out_shape,
            grid_spec=pltpu.PrefetchScalarGridSpec(
                num_scalar_prefetch=0,
                grid=(gm, gn),
                in_specs=[
                    pl.BlockSpec((tm, tk), lambda i, j: (i, 0)),
                    pl.BlockSpec((tk, tn), lambda i, j: (0, j)),
                    pl.BlockSpec((1, tn), lambda i, j: (0, j)),
                ],
                out_specs=pl.BlockSpec((tm, tn), lambda i, j: (i, j)),
            ),
            compiler_params=pltpu.CompilerParams(
                dimension_semantics=("parallel", "parallel"),
                vmem_limit_bytes=vmem_limit,
            ),
        )(xp, wp, bp)

    return pl.pallas_call(
        _linear_kernel_multi_k,
        out_shape=out_shape,
        grid_spec=pltpu.PrefetchScalarGridSpec(
            num_scalar_prefetch=0,
            grid=(gm, gn, gk),
            in_specs=[
                pl.BlockSpec((tm, tk), lambda i, j, k: (i, k)),
                pl.BlockSpec((tk, tn), lambda i, j, k: (k, j)),
                pl.BlockSpec((1, tn), lambda i, j, k: (0, j)),  # k-invariant, resident
            ],
            out_specs=pl.BlockSpec((tm, tn), lambda i, j, k: (i, j)),
            scratch_shapes=[pltpu.VMEM((tm, tn), jnp.float32)],
        ),
        compiler_params=pltpu.CompilerParams(
            dimension_semantics=("parallel", "parallel", "arbitrary"),
            vmem_limit_bytes=vmem_limit,
        ),
    )(xp, wp, bp)


@functools.partial(
    jax.jit,
    static_argnames=("tm", "tn", "tk", "n_out", "out_dtype", "in_dtype", "vmem_limit"),
)
def _linear_core(x, w_p, b_p, *, tm, tn, tk, n_out, out_dtype, in_dtype, vmem_limit):
    """jit so the x pad+cast and the output slice fuse with surrounding XLA ops."""
    M, K = x.shape
    Kp, Np = w_p.shape
    Mp = _round_up(M, tm)
    if (Mp, Kp) != (M, K):
        x = jnp.pad(x, ((0, Mp - M), (0, Kp - K)))
    # TODO(synk): when gn == 1, consider passing f32 x and casting in-kernel to skip this pass.
    x = x.astype(in_dtype)
    out = _run_pallas(x, w_p, b_p, tm=tm, tn=tn, tk=tk,
                      out_dtype=out_dtype, vmem_limit=vmem_limit)
    if (Mp, Np) != (M, n_out):
        out = out[:M, :n_out]
    return out


def linear_pallas(x, w, b=None, *, use_bf16=True, out_dtype=None,
                  tm=None, tn=None, tk=None, w_resident_budget=None):
    """y = x @ w + b with a tiled Pallas matmul (bf16-in / f32-acc by default)."""
    M, K = x.shape
    K2, N = w.shape
    assert K == K2, f"{K} != {K2}"
    if b is None:
        b = jnp.zeros((N,), jnp.float32)
    assert b.shape == (N,)
    out_dtype = x.dtype if out_dtype is None else out_dtype
    in_dtype = jnp.bfloat16 if use_bf16 else jnp.float32

    cfg = _gen_config()
    plan = _plan_kn(K, N, cfg, in_dtype, tn_target=tn, tk_target=tk,
                    w_resident_budget=w_resident_budget)
    tm_ = _plan_m(M, plan, cfg, in_dtype, out_dtype, tm_target=tm)
    # One-off pad/cast of W, b (LinearPallas caches these instead of paying it per call).
    w_p, b_p = _pad_params(w, b, plan, in_dtype)
    return _linear_core(x, w_p, b_p, tm=tm_, tn=plan["tn"], tk=plan["tk"],
                        n_out=N, out_dtype=out_dtype, in_dtype=in_dtype,
                        vmem_limit=cfg["vmem"])


class LinearPallas:
    """Mirrors ptens Linear: W (in_channels, out_channels), bias (out_channels,),
    xavier-uniform W, zero bias.  NOTE: by default the matmul runs bf16-in / f32-acc on
    the MXU (set use_bf16=False for strict f32 numerics).  The padded/cast weight and
    bias are cached at init, so each forward is a single streaming pass over x when the
    weight fits VMEM."""

    def __init__(self, in_channels: int, out_channels: int, bias: bool = True, *,
                 key, use_bf16: bool = True, out_dtype=None):
        bound = math.sqrt(6.0 / (in_channels + out_channels))  # xavier_uniform_
        self.w = jax.random.uniform(
            key, (in_channels, out_channels), jnp.float32, minval=-bound, maxval=bound
        )
        self.b = jnp.zeros((out_channels,), jnp.float32) if bias else None
        self.in_channels = in_channels
        self.out_channels = out_channels
        self.use_bf16 = use_bf16
        self._out_dtype = out_dtype
        self._in_dtype = jnp.bfloat16 if use_bf16 else jnp.float32
        self._cfg = _gen_config()
        # Plan over (K, N) once; cache padded + cast W/b (removes per-call K*N HBM passes).
        self._plan = _plan_kn(in_channels, out_channels, self._cfg, self._in_dtype)
        b_full = self.b if self.b is not None else jnp.zeros((out_channels,), jnp.float32)
        self._w_p, self._b_p = _pad_params(self.w, b_full, self._plan, self._in_dtype)

    def __call__(self, x):
        assert x.shape[-1] == self.in_channels, f"{x.shape[-1]} != {self.in_channels}"
        out_dtype = x.dtype if self._out_dtype is None else self._out_dtype
        tm = _plan_m(x.shape[0], self._plan, self._cfg, self._in_dtype, out_dtype)
        return _linear_core(
            x, self._w_p, self._b_p,
            tm=tm, tn=self._plan["tn"], tk=self._plan["tk"],
            n_out=self.out_channels, out_dtype=out_dtype,
            in_dtype=self._in_dtype, vmem_limit=self._cfg["vmem"],
        )


def _ref_bf16(x, w, b):
    # reference with the same bf16-in / f32-acc numerics as the kernel
    xb = x.astype(jnp.bfloat16).astype(jnp.float32)
    wb = w.astype(jnp.bfloat16).astype(jnp.float32)
    return jnp.dot(xb, wb, preferred_element_type=jnp.float32) + b


if __name__ == "__main__":
    key = jax.random.PRNGKey(0)
    k_x, k_w, k_x2, k_w2, k_x3, k_w3 = jax.random.split(key, 6)

    # Test 1: small shape -> W-resident single-K path (padded to lane-dense 128-wide output).
    N_ROWS, IN_C, OUT_C = 8, 32, 64
    x = jax.random.normal(k_x, (N_ROWS, IN_C), jnp.float32)
    mod = LinearPallas(IN_C, OUT_C, bias=True, key=k_w)
    y = jax.block_until_ready(mod(x))
    y_ref = _ref_bf16(x, mod.w, mod.b)
    assert y.shape == (N_ROWS, OUT_C)
    assert jnp.allclose(y, y_ref, atol=1e-2, rtol=1e-2)

    # Test 2: ragged shape forced down the tiled multi-K accumulator path (small tile
    # overrides + w_resident_budget=0), exercising padding-aware ragged tiling.
    M2, K2, N2 = 300, 1100, 200
    x2 = jax.random.normal(k_x2, (M2, K2), jnp.float32)
    w2 = jax.random.uniform(k_w2, (K2, N2), jnp.float32, minval=-0.05, maxval=0.05)
    b2 = jnp.zeros((N2,), jnp.float32)
    y2 = jax.block_until_ready(
        linear_pallas(x2, w2, b2, tm=128, tn=128, tk=512, w_resident_budget=0)
    )
    y2_ref = _ref_bf16(x2, w2, b2)
    assert y2.shape == (M2, N2)
    assert jnp.allclose(y2, y2_ref, atol=1e-2, rtol=1e-2)

    # Test 3: taller x through the class default (W-resident streaming) path.
    M3, K3, N3 = 1024, 256, 384
    x3 = jax.random.normal(k_x3, (M3, K3), jnp.float32)
    mod3 = LinearPallas(K3, N3, bias=True, key=k_w3)
    y3 = jax.block_until_ready(mod3(x3))
    y3_ref = _ref_bf16(x3, mod3.w, mod3.b)
    assert y3.shape == (M3, N3)
    assert jnp.allclose(y3, y3_ref, atol=1e-2, rtol=1e-2)

    print("KERNEL_OK")
</pallas_src>

<mosaic_0001>
module attributes {stable_mosaic.version = 11 : i64} {
  func.func @_linear_kernel_single_k(%arg0: i32, %arg1: i32, %arg2: memref<16x128xbf16, #tpu.memory_space<vmem>>, %arg3: memref<128x128xbf16, #tpu.memory_space<vmem>>, %arg4: memref<1x128xf32, #tpu.memory_space<vmem>>, %arg5: memref<16x128xf32, #tpu.memory_space<vmem>>) attributes {dimension_semantics = [#tpu.dimension_semantics<parallel>, #tpu.dimension_semantics<parallel>], iteration_bounds = array<i64: 1, 1>, scalar_prefetch = 0 : i64, scratch_operands = 0 : i64, tpu.core_type = #tpu.core_type<tc>, window_params = [{transform_indices = @transform_0, window_bounds = array<i64: 16, 128>}, {transform_indices = @transform_1, window_bounds = array<i64: 128, 128>}, {transform_indices = @transform_2, window_bounds = array<i64: 1, 128>}, {transform_indices = @transform_3, window_bounds = array<i64: 16, 128>}]} {
    %c0 = arith.constant 0 : index
    %c0_0 = arith.constant 0 : index
    %0 = vector.load %arg2[%c0, %c0_0] : memref<16x128xbf16, #tpu.memory_space<vmem>>, vector<16x128xbf16>
    %c0_1 = arith.constant 0 : index
    %c0_2 = arith.constant 0 : index
    %1 = vector.load %arg3[%c0_1, %c0_2] : memref<128x128xbf16, #tpu.memory_space<vmem>>, vector<128x128xbf16>
    %cst = arith.constant dense<0.000000e+00> : vector<16x128xf32>
    %2 = tpu.matmul %0, %1, %cst {dimension_numbers = #tpu.dot_dimension_numbers<[1], [0], [0], [1], [0, 0, 1, 1], [], []>} : vector<16x128xbf16>, vector<128x128xbf16>, vector<16x128xf32> -> vector<16x128xf32>
    %c0_3 = arith.constant 0 : index
    %c0_4 = arith.constant 0 : index
    %3 = vector.load %arg4[%c0_3, %c0_4] : memref<1x128xf32, #tpu.memory_space<vmem>>, vector<1x128xf32>
    %4 = vector.broadcast %3 : vector<1x128xf32> to vector<16x128xf32>
    %5 = arith.addf %2, %4 : vector<16x128xf32>
    %c0_5 = arith.constant 0 : index
    %c0_6 = arith.constant 0 : index
    %6 = vector.load %arg5[%c0_5, %c0_6] : memref<16x128xf32, #tpu.memory_space<vmem>>, vector<16x128xf32>
    tpu.vector_store %arg5[%c0_5, %c0_6], %5 {strides = array<i32>} : memref<16x128xf32, #tpu.memory_space<vmem>>, vector<16x128xf32>,
    return
  }
  func.func @transform_0(%arg0: i32, %arg1: i32) -> (i32, i32) {
    %c0_i32 = arith.constant 0 : i32
    %c0_i32_0 = arith.constant 0 : i32
    return %arg0, %c0_i32 : i32, i32
  }
  func.func @transform_1(%arg0: i32, %arg1: i32) -> (i32, i32) {
    %c0_i32 = arith.constant 0 : i32
    %c0_i32_0 = arith.constant 0 : i32
    return %c0_i32, %arg1 : i32, i32
  }
  func.func @transform_2(%arg0: i32, %arg1: i32) -> (i32, i32) {
    %c0_i32 = arith.constant 0 : i32
    %c0_i32_0 = arith.constant 0 : i32
    return %c0_i32, %arg1 : i32, i32
  }
  func.func @transform_3(%arg0: i32, %arg1: i32) -> (i32, i32) {
    %c0_i32 = arith.constant 0 : i32
    return %arg0, %arg1 : i32, i32
  }
}

</mosaic_0001>

<llo_original>
// kernel: _linear_core.1
$region0: #{_linear_core.1}
  #allocation0 [shape = 'u32[]', space=smem, size = 0x4, offset = 0x4, fixed_abs, tag = 'smem constant byte address 0x4 - core index']
  #allocation1 [shape = 'u32[144,128]{1,0:T(1,128)}', space=vmem, size = 0x12000, scoped, tag = 'internal scratch']
  %s0 = inlined_call_operand.vmem [shape: bf16[16,128], index: 0, kind: input, shape index: {}]
  %s1 = inlined_call_operand.hbm [shape: bf16[128,128], index: 1, kind: input, shape index: {}]
  %s2 = inlined_call_operand.vmem [shape: f32[1,128], index: 2, kind: input, shape index: {}]
  %s3 = inlined_call_operand.vmem [shape: f32[16,128], index: 3, kind: output, shape index: {}]
  %s4 = sld [smem:[#allocation0]]
  $region26: #{_linear_core.1} parent=0
    _
  %s6 = ssub.s32 1, %s4
  %s7 = scalar_select 0, %s6, %s4
  $region1: #{_linear_core.1} parent=0
    #allocation2 [shape = 'u8[32768]{0}', space=vmem, size = 0x8000, scoped, tag = 'input window, operand 1, single buffered']
    #allocation3 [shape = 's32[1]{0}', space=sflag, size = 0x4, scoped, tag = 'scoped memory for _linear_core.1']
    %8 = vsyncpa [#allocation3], 0
    // Predicated region
    $region2: #{_linear_core.1} parent=1 // pred_check
      _
    $region3: #{_linear_core.1} parent=1 // pred_check_branch
      %10 = sbr.rel (0) target = $region5
    $region4: #{_linear_core.1} parent=1 // pred_region
      _
    $region5: #{_linear_core.1} parent=1 // pred_fallthru
      _
    // Predicated region
    $region6: #{_linear_core.1} parent=1 // pred_check
      _
    $region7: #{_linear_core.1} parent=1 // pred_check_branch
      %12 = sbr.rel (0) target = $region9
    $region8: #{_linear_core.1} parent=1 // pred_region
      %s14 = ssub.s32 1024, 1024
      %15 = vsyncadd [#allocation3], %s14
      %s16 = sshll.u32 [#allocation2], 4
      %s17 = int_to_ptr.vmem [resolvable:$true] %s16
      %22 = dma.hbm_to_vmem [thread:$0]  %s1, 1024, %s17, [#allocation3], 64, 64, 4
    $region9: #{_linear_core.1} parent=1 // pred_fallthru
      _
    // Predicated region
    $region10: #{_linear_core.1} parent=1 // pred_check
      _
    $region11: #{_linear_core.1} parent=1 // pred_check_branch
      %24 = sbr.rel (0) target = $region13
    $region12: #{_linear_core.1} parent=1 // pred_region
      _
    $region13: #{_linear_core.1} parent=1 // pred_fallthru
      _
    // Predicated region
    $region14: #{_linear_core.1} parent=1 // pred_check
      _
    $region15: #{_linear_core.1} parent=1 // pred_check_branch
      %26 = sbr.rel (0) target = $region17
    $region16: #{_linear_core.1} parent=1 // pred_region
      %27 = dma.done [#allocation3], 1024
    $region17: #{_linear_core.1} parent=1 // pred_fallthru
      _
    %v29 = vld [vmem:[%s0] sm:$0xf]
    %v30 = vld [vmem:[%s0 + $0x4] sm:$0xf]
    %v31 = vld [vmem:[#allocation2] sm:$0xf]
    %v32 = vld [vmem:[#allocation2 + $0x4] sm:$0xf]
    %v33 = vld [vmem:[#allocation2 + $0x8] sm:$0xf]
    %v34 = vld [vmem:[#allocation2 + $0xc] sm:$0xf]
    %v35 = vld [vmem:[#allocation2 + $0x10] sm:$0xf]
    %v36 = vld [vmem:[#allocation2 + $0x14] sm:$0xf]
    %v37 = vld [vmem:[#allocation2 + $0x18] sm:$0xf]
    %v38 = vld [vmem:[#allocation2 + $0x1c] sm:$0xf]
    %v39 = vld [vmem:[#allocation2 + $0x20] sm:$0xf]
    %v40 = vld [vmem:[#allocation2 + $0x24] sm:$0xf]
    %v41 = vld [vmem:[#allocation2 + $0x28] sm:$0xf]
    %v42 = vld [vmem:[#allocation2 + $0x2c] sm:$0xf]
    %v43 = vld [vmem:[#allocation2 + $0x30] sm:$0xf]
    %v44 = vld [vmem:[#allocation2 + $0x34] sm:$0xf]
    %v45 = vld [vmem:[#allocation2 + $0x38] sm:$0xf]
    %v46 = vld [vmem:[#allocation2 + $0x3c] sm:$0xf]
    %v47 = vld [vmem:[%s2] sm:$0x1]
    %v49 = vlaneseq
    %v50 = vshrl.u32 %v49, 7
    %v51 = vsub.s32 0, %v50
    %v52 = vrot.slane %v47, %v51
    %v56 = vunpack.c.l.b16 %v29
    %v57 = vunpack.c.l.b16 %v30
    %v58 = vpack.c.b16 %v57, %v56
    %v76 = vunpack.c.l.b16 %v31
    %v77 = vunpack.c.l.b16 %v32
    %v78 = vunpack.c.l.b16 %v33
    %v79 = vunpack.c.l.b16 %v34
    %v80 = vunpack.c.l.b16 %v35
    %v81 = vunpack.c.l.b16 %v36
    %v82 = vunpack.c.l.b16 %v37
    %v83 = vunpack.c.l.b16 %v38
    %v84 = vunpack.c.l.b16 %v39
    %v85 = vunpack.c.l.b16 %v40
    %v86 = vunpack.c.l.b16 %v41
    %v87 = vunpack.c.l.b16 %v42
    %v88 = vunpack.c.l.b16 %v43
    %v89 = vunpack.c.l.b16 %v44
    %v90 = vunpack.c.l.b16 %v45
    %v91 = vunpack.c.l.b16 %v46
    %v92 = vpack.c.b16 %v77, %v76
    %v93 = vpack.c.b16 %v79, %v78
    %v94 = vpack.c.b16 %v81, %v80
    %v95 = vpack.c.b16 %v83, %v82
    %v96 = vpack.c.b16 %v85, %v84
    %v97 = vpack.c.b16 %v87, %v86
    %v98 = vpack.c.b16 %v89, %v88
    %v99 = vpack.c.b16 %v91, %v90
    %108 = vmatprep.subr.bf16.mxu0 0
    %109 = vmatpush1.bf16.msra.mxu0 %v92
    %110 = vmatprep.subr.bf16.mxu0 0
    %111 = vmatpush1.bf16.msra.mxu0 %v93
    %112 = vmatprep.subr.bf16.mxu0 0
    %113 = vmatpush1.bf16.msra.mxu0 %v94
    %114 = vmatprep.subr.bf16.mxu0 0
    %115 = vmatpush1.bf16.msra.mxu0 %v95
    %116 = vmatprep.subr.bf16.mxu0 0
    %117 = vmatpush1.bf16.msra.mxu0 %v96
    %118 = vmatprep.subr.bf16.mxu0 0
    %119 = vmatpush1.bf16.msra.mxu0 %v97
    %120 = vmatprep.subr.bf16.mxu0 0
    %121 = vmatpush1.bf16.msra.mxu0 %v98
    %122 = vmatprep.subr.bf16.mxu0 0
    %123 = vmatpush1.bf16.msra.mxu0 %v99
    %124 = vmatprep.subr.bf16.mxu0 0
    %125 = vmatpush1.bf16.msra.mxu0 0
    %126 = vmatprep.subr.bf16.mxu0 0
    %127 = vmatpush1.bf16.msra.mxu0 0
    %128 = vmatprep.subr.bf16.mxu0 0
    %129 = vmatpush1.bf16.msra.mxu0 0
    %130 = vmatprep.subr.bf16.mxu0 0
    %131 = vmatpush1.bf16.msra.mxu0 0
    %132 = vmatprep.subr.bf16.mxu0 0
    %133 = vmatpush1.bf16.msra.mxu0 0
    %134 = vmatprep.subr.bf16.mxu0 0
    %135 = vmatpush1.bf16.msra.mxu0 0
    %136 = vmatprep.subr.bf16.mxu0 0
    %137 = vmatpush1.bf16.msra.mxu0 0
    %138 = vmatprep.subr.bf16.mxu0 0
    %139 = vmatpush1.bf16.msra.mxu0 0
    %140 = vmatprep.mubr.bf16.mxu0 0
    %141 = vmatmul.mubr.bf16.gmra.mrb[0].mxu0 %v58
    %v142 = vpop.f32.mrb[0].mxu0
    %v143 = vadd.f32 %v52, %v142
    %v144 = vpop.f32.mrb[0].mxu0
    %v145 = vpop.f32.mrb[0].mxu0
    %v146 = vadd.f32 %v52, %v145
    %v147 = vpop.f32.mrb[0].mxu0
    %148 = vdwg.mxu0
    %149 = vst [vmem:[%s3] sm:$0xff] %v143
    %150 = vst [vmem:[%s3 + $0x8] sm:$0xff] %v146
    // Predicated region
    $region18: #{_linear_core.1} parent=1 // pred_check
      _
    $region19: #{_linear_core.1} parent=1 // pred_check_branch
      %152 = sbr.rel (0) target = $region21
    $region20: #{_linear_core.1} parent=1 // pred_region
      _
    $region21: #{_linear_core.1} parent=1 // pred_fallthru
      _
    // Predicated region
    $region22: #{_linear_core.1} parent=1 // pred_check
      _
    $region23: #{_linear_core.1} parent=1 // pred_check_branch
      %154 = sbr.rel (0) target = $region25
    $region24: #{_linear_core.1} parent=1 // pred_region
      _
    $region25: #{_linear_core.1} parent=1 // pred_fallthru
      _
    %155 = vsyncpa [#allocation3], 1

</llo_original>
